<compile_context>
chip_gen: v6e
topology: v6e:2x2x1
jax: 0.10.0
libtpu: 0.0.40
codegen_flags: <defaults>
</compile_context>

<pallas_src>
import functools

import jax
import jax.numpy as jnp
from jax.experimental import pallas as pl
from jax.experimental.pallas import tpu as pltpu


def _copy_kernel(x_ref, o_ref):
    # Element-wise identity: forward(data) == data.
    o_ref[...] = x_ref[...]


_LANE_CANDIDATES = (512, 256, 128)
# <= ~2 MiB per block: with in+out double-buffered that is <= 8 MiB resident,
# safely inside v5e's 16 MiB default scoped VMEM and v7x's 64 MiB physical VMEM.
_BLOCK_BYTES_BUDGET = 2 * 1024 * 1024


def _choose_lanes(n: int):
    # Prefer lane-dense layouts whose row count is sublane (8) aligned.
    for lanes in _LANE_CANDIDATES:
        if n % lanes == 0 and (n // lanes) % 8 == 0:
            return lanes
    for lanes in _LANE_CANDIDATES:
        if n % lanes == 0:
            return lanes
    return None


@functools.partial(jax.jit, static_argnames=())
def mock_model_forward(data: jax.Array, weight: jax.Array) -> jax.Array:
    """Pallas equivalent of MockModel.forward.

    `weight` mirrors MockModel._weight (ones(1), float32); forward() ignores
    it, exactly like the PyTorch reference.
    """
    del weight  # parameter exists on the module but is unused in forward()

    # Degenerate inputs: nothing to copy — the identity is just `data`.
    if data.ndim == 0 or data.size == 0:
        return data

    orig_shape = data.shape
    orig_dtype = data.dtype
    n = data.size

    # Flatten to a lane-dense 2-D slab: last axis a multiple of 128 lanes so
    # stores are full-vreg `vst` (no masked partial stores).
    flat = data.reshape(-1)
    lanes = _choose_lanes(n)
    pad = 0
    if lanes is None:
        lanes = 128
        pad = (-n) % lanes
        flat = jnp.pad(flat, (0, pad))
    rows = flat.size // lanes
    x2d = flat.reshape(rows, lanes)

    # Tile rows so each block stays within the VMEM budget; full-extent block
    # when the whole array already fits (always layout-legal).
    itemsize = jnp.dtype(orig_dtype).itemsize
    max_rows = max(8, (_BLOCK_BYTES_BUDGET // (lanes * itemsize)) // 8 * 8)
    if rows <= max_rows:
        tile_r = rows
        grid = (1,)
    else:
        tile_r = max_rows  # multiple of 8 -> satisfies the (8, 128) rule
        grid = (pl.cdiv(rows, tile_r),)

    nbytes = rows * lanes * itemsize
    out2d = pl.pallas_call(
        _copy_kernel,
        out_shape=jax.ShapeDtypeStruct((rows, lanes), orig_dtype),
        grid=grid,
        in_specs=[pl.BlockSpec((tile_r, lanes), lambda i: (i, 0))],
        out_specs=pl.BlockSpec((tile_r, lanes), lambda i: (i, 0)),
        # Output aliases the input slab: no extra HBM allocation for the copy.
        input_output_aliases={0: 0},
        cost_estimate=pl.CostEstimate(
            flops=0, transcendentals=0, bytes_accessed=2 * nbytes),
        compiler_params=pltpu.CompilerParams(
            # Row axis is independent -> shard across both TCs on v7x; neutral
            # on single-TC v5e/v6e.
            dimension_semantics=("parallel",),
        ),
    )(x2d)

    out_flat = out2d.reshape(-1)
    if pad:
        out_flat = out_flat[:n]
    return out_flat.reshape(orig_shape)


if __name__ == "__main__":
    key = jax.random.PRNGKey(0)
    # Small NCHW input consistent with a generic model forward: (B, C, H, W).
    x = jax.random.normal(key, (2, 4, 16, 16), dtype=jnp.float32)

    # Deterministic parameter init matching MockModel.__init__:
    # torch.nn.Parameter(torch.ones(1, dtype=torch.float32))
    weight = jnp.ones((1,), dtype=jnp.float32)

    y = mock_model_forward(x, weight)
    y = jax.block_until_ready(y)

    # Correctness check: forward is identity.
    assert y.shape == x.shape and y.dtype == x.dtype
    assert bool(jnp.all(y == x))

    print("KERNEL_OK")
</pallas_src>

<mosaic_0001>
module attributes {stable_mosaic.version = 11 : i64} {
  func.func @_copy_kernel(%arg0: i32, %arg1: memref<8x256xf32, #tpu.memory_space<vmem>>, %arg2: memref<8x256xf32, #tpu.memory_space<vmem>>) attributes {dimension_semantics = [#tpu.dimension_semantics<parallel>], iteration_bounds = array<i64: 1>, scalar_prefetch = 0 : i64, scratch_operands = 0 : i64, tpu.core_type = #tpu.core_type<tc>, window_params = [{transform_indices = @transform_0, window_bounds = array<i64: 8, 256>}, {transform_indices = @transform_1, window_bounds = array<i64: 8, 256>}]} {
    %c0 = arith.constant 0 : index
    %c0_0 = arith.constant 0 : index
    %0 = vector.load %arg1[%c0, %c0_0] : memref<8x256xf32, #tpu.memory_space<vmem>>, vector<8x256xf32>
    %c0_1 = arith.constant 0 : index
    %c0_2 = arith.constant 0 : index
    %1 = vector.load %arg2[%c0_1, %c0_2] : memref<8x256xf32, #tpu.memory_space<vmem>>, vector<8x256xf32>
    tpu.vector_store %arg2[%c0_1, %c0_2], %0 {strides = array<i32>} : memref<8x256xf32, #tpu.memory_space<vmem>>, vector<8x256xf32>,
    return
  }
  func.func @transform_0(%arg0: i32) -> (i32, i32) {
    %c0_i32 = arith.constant 0 : i32
    %c0_i32_0 = arith.constant 0 : i32
    return %arg0, %c0_i32 : i32, i32
  }
  func.func @transform_1(%arg0: i32) -> (i32, i32) {
    %c0_i32 = arith.constant 0 : i32
    %c0_i32_0 = arith.constant 0 : i32
    return %arg0, %c0_i32 : i32, i32
  }
}

</mosaic_0001>

<llo_original>
// kernel: mock_model_forward.1
$region0: #{mock_model_forward.1}
  #allocation0 [shape = 'u32[]', space=smem, size = 0x4, offset = 0x4, fixed_abs, tag = 'smem constant byte address 0x4 - core index']
  #allocation1 [shape = 'u32[144,128]{1,0:T(1,128)}', space=vmem, size = 0x12000, scoped, tag = 'internal scratch']
  %s0 = inlined_call_operand.vmem [shape: f32[8,256], index: 0, kind: input, shape index: {}, may-alias: {0,1}]
  %s1 = inlined_call_operand.vmem [shape: f32[8,256], index: 1, kind: output, shape index: {}, may-alias: {0,1}]
  %s2 = sld [smem:[#allocation0]]
  $region14: #{mock_model_forward.1} parent=0
    _
  %s4 = ssub.s32 1, %s2
  %s5 = scalar_select 0, %s4, %s2
  // Predicated region
  $region2: #{mock_model_forward.1} parent=0 // pred_check
    _
  $region3: #{mock_model_forward.1} parent=0 // pred_check_branch
    %7 = sbr.rel (0) target = $region5
  $region4: #{mock_model_forward.1} parent=0 // pred_region
    _
  $region5: #{mock_model_forward.1} parent=0 // pred_fallthru
    _
  %v8 = vld [vmem:[%s0] sm:$0xff]
  %v9 = vld [vmem:[%s0 + $0x8] sm:$0xff]
  %10 = vst [vmem:[%s1] sm:$0xff] %v8
  %11 = vst [vmem:[%s1 + $0x8] sm:$0xff] %v9
  // Predicated region
  $region6: #{mock_model_forward.1} parent=0 // pred_check
    _
  $region7: #{mock_model_forward.1} parent=0 // pred_check_branch
    %13 = sbr.rel (0) target = $region9
  $region8: #{mock_model_forward.1} parent=0 // pred_region
    _
  $region9: #{mock_model_forward.1} parent=0 // pred_fallthru
    _
  // Predicated region
  $region10: #{mock_model_forward.1} parent=0 // pred_check
    _
  $region11: #{mock_model_forward.1} parent=0 // pred_check_branch
    %15 = sbr.rel (0) target = $region13
  $region12: #{mock_model_forward.1} parent=0 // pred_region
    _
  $region13: #{mock_model_forward.1} parent=0 // pred_fallthru
    _

</llo_original>
